<compile_context>
chip_gen: v7x
topology: tpu7x:2x2x1
jax: 0.10.0
libtpu: 0.0.40
codegen_flags: <defaults>
</compile_context>

<pallas_src>
from functools import partial

import jax
import jax.numpy as jnp
import numpy as np
from jax import lax
from jax.experimental import pallas as pl
from jax.experimental.pallas import tpu as pltpu


def _heads_per_block(num_heads, head_dim):
    """Smallest head group whose lane width is a multiple of 128 (aligned
    slices / ctx stores), kept <= 512 lanes to bound per-block vreg pressure.
    Falls back to 1 (plain per-head scratch stores) when no such group exists."""
    for k in range(1, num_heads + 1):
        if num_heads % k == 0 and (k * head_dim) % 128 == 0 and k * head_dim <= 512:
            return k
    return 1


def attention_kernel(x_ref, qkv_w_ref, proj_w_ref, proj_b_ref, o_ref, ctx_ref,
                     *, num_heads, heads_per_block, n_valid):
    n_pad = x_ref.shape[1]
    C = x_ref.shape[2]
    hd = C // num_heads

    # ---- fused QKV projection ------------------------------------------------
    # scale is pre-folded into the q-columns of qkv_w (wrapper), so there is no
    # in-kernel scale multiply.  One MXU dot, bf16 operands, f32 accumulation,
    # then a single bulk bf16 cast (instead of 3*H per-head casts).
    x = x_ref[0].astype(jnp.bfloat16)                            # (N, C)
    qkv = jnp.dot(x, qkv_w_ref[...],
                  preferred_element_type=jnp.float32)            # (N, 3C) f32
    qkv = qkv.astype(jnp.bfloat16)                               # single bulk cast

    # Key-padding mask, only materialized when the wrapper actually padded N.
    if n_valid < n_pad:
        key_pos = lax.broadcasted_iota(jnp.int32, (n_pad, n_pad), 1)
        key_mask = key_pos < n_valid                             # hoisted out of the loop
    else:
        key_mask = None

    # ---- per-head attention, written block-by-block into VMEM scratch --------
    # Heads are grouped into 128-lane-aligned blocks (pairs for hd=64); each
    # block's context is stored straight into ctx_ref, bounding its live range.
    bw = heads_per_block * hd
    for blk in range(num_heads // heads_per_block):
        base = blk * bw                                          # static; 128-aligned when possible
        qb = qkv[:, base:base + bw]
        kb = qkv[:, C + base:C + base + bw]
        vb = qkv[:, 2 * C + base:2 * C + base + bw]

        parts = []
        for j in range(heads_per_block):
            lo = j * hd
            qh = qb[:, lo:lo + hd]                               # (N, hd) bf16, scale folded in
            kh = kb[:, lo:lo + hd]
            vh = vb[:, lo:lo + hd]

            # scores = (q * scale) @ k^T : contract head_dim of both operands.
            s = lax.dot_general(qh, kh, (((1,), (1,)), ((), ())),
                                preferred_element_type=jnp.float32)   # (N, N) f32
            if key_mask is not None:
                s = jnp.where(key_mask, s, -1e30)

            s = s - jnp.max(s, axis=-1, keepdims=True)
            p = jnp.exp(s)
            inv = pl.reciprocal(jnp.sum(p, axis=-1, keepdims=True), approx=True)
            p = (p * inv).astype(jnp.bfloat16)

            parts.append(jnp.dot(p, vh,
                                 preferred_element_type=jnp.float32).astype(jnp.bfloat16))

        blk_ctx = parts[0] if heads_per_block == 1 else jnp.concatenate(parts, axis=-1)
        ctx_ref[:, base:base + bw] = blk_ctx                     # aligned VMEM store

    # ---- output projection ----------------------------------------------------
    out = jnp.dot(ctx_ref[...], proj_w_ref[...],
                  preferred_element_type=jnp.float32) + proj_b_ref[...]
    o_ref[0] = out.astype(o_ref.dtype)


def attention(x, params, *, num_heads):
    B, N, C = x.shape
    assert C % num_heads == 0
    hd = C // num_heads
    scale = hd ** -0.5

    # Fold the softmax scale into the q-columns of the fused qkv weight (free,
    # done once at parameter prep) and store weights as bf16: full MXU rate,
    # half the weight VMEM, no in-kernel scale / per-head casts.
    qkv_w = params['qkv_w'].astype(jnp.float32)
    qkv_w = qkv_w.at[:, :C].multiply(scale).astype(jnp.bfloat16)       # (C, 3C)
    proj_w = params['proj_w'].astype(jnp.bfloat16)                     # (C, C)
    proj_b = params['proj_b'].reshape(1, C).astype(jnp.float32)        # (1, C)

    # Pad the token axis to a sublane multiple so vregs / MXU passes are full.
    # (For production ViT shapes, pad the key axis to 128, e.g. 197 -> 256.)
    n_pad = ((N + 7) // 8) * 8
    x_p = x if n_pad == N else jnp.pad(x, ((0, 0), (0, n_pad - N), (0, 0)))

    hpb = _heads_per_block(num_heads, hd)
    kernel = partial(attention_kernel, num_heads=num_heads,
                     heads_per_block=hpb, n_valid=N)

    # VMEM budget from the actual footprint (weights + double-buffered x/out
    # blocks + resident intermediates), floored at the 32 MiB scoped default
    # and capped at 56 MiB (below v7x's 64 MiB physical VMEM).
    x_bytes = jnp.dtype(x.dtype).itemsize
    weight_bytes = (C * 3 * C + C * C + C) * 2                  # bf16 weights + f32 bias
    io_bytes = n_pad * C * x_bytes * 2                          # one x block + one out block
    inter_bytes = (n_pad * 3 * C * (4 + 2)                      # qkv f32 + bf16
                   + 2 * n_pad * n_pad * 4                      # score / prob tiles
                   + n_pad * C * (4 + 2))                       # proj accumulator + ctx scratch
    est = 2 * weight_bytes + 2 * io_bytes + inter_bytes         # x2: pipeline double buffering
    vmem_limit = int(min(max(2 * est, 32 * 1024 * 1024), 56 * 1024 * 1024))

    out = pl.pallas_call(
        kernel,
        out_shape=jax.ShapeDtypeStruct((B, n_pad, C), x.dtype),
        grid_spec=pltpu.PrefetchScalarGridSpec(
            num_scalar_prefetch=0,
            grid=(B,),
            in_specs=[
                pl.BlockSpec((1, n_pad, C), lambda b: (b, 0, 0)),   # x (one image / step)
                pl.BlockSpec((C, 3 * C), lambda b: (0, 0)),         # fused qkv weight (grid-invariant)
                pl.BlockSpec((C, C), lambda b: (0, 0)),             # proj weight (grid-invariant)
                pl.BlockSpec((1, C), lambda b: (0, 0)),             # proj bias
            ],
            out_specs=pl.BlockSpec((1, n_pad, C), lambda b: (b, 0, 0)),
            scratch_shapes=[pltpu.VMEM((n_pad, C), jnp.bfloat16)],  # per-head ctx accumulator
        ),
        compiler_params=pltpu.CompilerParams(
            dimension_semantics=("parallel",),
            vmem_limit_bytes=vmem_limit),
    )(x_p, qkv_w, proj_w, proj_b)

    return out if n_pad == N else out[:, :N, :]


def ref_attention(x, qkv_w, proj_w, proj_b, *, num_heads, scale=None):
    """Pure-JAX reference mirroring the PyTorch Attention.forward (eval mode)."""
    B, N, C = x.shape
    hd = C // num_heads
    if scale is None:
        scale = hd ** -0.5
    qkv = (x @ qkv_w).reshape(B, N, 3, num_heads, hd).transpose(2, 0, 3, 1, 4)
    q, k, v = qkv[0], qkv[1], qkv[2]
    attn = jax.nn.softmax(jnp.einsum('bhqd,bhkd->bhqk', q, k) * scale, axis=-1)
    ctx = jnp.einsum('bhqk,bhkd->bhqd', attn, v).transpose(0, 2, 1, 3).reshape(B, N, C)
    return ctx @ proj_w + proj_b


if __name__ == "__main__":
    B, N, C = 2, 8, 32
    num_heads = 4
    hd = C // num_heads
    scale = hd ** -0.5

    key = jax.random.PRNGKey(0)
    k_x, k_qkv, k_pw, k_pb = jax.random.split(key, 4)
    x = jax.random.normal(k_x, (B, N, C), jnp.float32)
    params = {
        'qkv_w': jax.random.normal(k_qkv, (C, 3 * C), jnp.float32) * 0.02,
        'proj_w': jax.random.normal(k_pw, (C, C), jnp.float32) * 0.02,
        'proj_b': jax.random.normal(k_pb, (1, C), jnp.float32) * 0.02,
    }

    out = jax.block_until_ready(attention(x, params, num_heads=num_heads))

    # Reference uses the kernel's effective bf16 weights (scale folded into the
    # q-columns) so the comparison only measures the bf16 activation casts and
    # the approximate softmax reciprocal inside the kernel.
    qkv_w_eff = (params['qkv_w'].at[:, :C].multiply(scale)
                 .astype(jnp.bfloat16).astype(jnp.float32))
    proj_w_eff = params['proj_w'].astype(jnp.bfloat16).astype(jnp.float32)
    ref = ref_attention(x, qkv_w_eff, proj_w_eff, params['proj_b'],
                        num_heads=num_heads, scale=1.0)
    np.testing.assert_allclose(np.asarray(out), np.asarray(ref), rtol=2e-2, atol=2e-2)

    print("KERNEL_OK")
</pallas_src>

<mosaic_0001>
module attributes {stable_mosaic.version = 11 : i64} {
  func.func @attention_kernel(%arg0: i32, %arg1: memref<1x8x32xf32, #tpu.memory_space<vmem>>, %arg2: memref<32x96xbf16, #tpu.memory_space<vmem>>, %arg3: memref<32x32xbf16, #tpu.memory_space<vmem>>, %arg4: memref<1x32xf32, #tpu.memory_space<vmem>>, %arg5: memref<1x8x32xf32, #tpu.memory_space<vmem>>, %arg6: memref<8x32xbf16, #tpu.memory_space<vmem>>) attributes {dimension_semantics = [#tpu.dimension_semantics<parallel>], iteration_bounds = array<i64: 2>, scalar_prefetch = 0 : i64, scratch_operands = 1 : i64, tpu.core_type = #tpu.core_type<tc>, window_params = [{transform_indices = @transform_0, window_bounds = array<i64: 1, 8, 32>}, {pipeline_mode = #tpu.pipeline_mode<synchronous>, transform_indices = @transform_1, window_bounds = array<i64: 32, 96>}, {pipeline_mode = #tpu.pipeline_mode<synchronous>, transform_indices = @transform_2, window_bounds = array<i64: 32, 32>}, {pipeline_mode = #tpu.pipeline_mode<synchronous>, transform_indices = @transform_3, window_bounds = array<i64: 1, 32>}, {transform_indices = @transform_4, window_bounds = array<i64: 1, 8, 32>}]} {
    %c0 = arith.constant 0 : index
    %c0_0 = arith.constant 0 : index
    %c0_1 = arith.constant 0 : index
    %0 = vector.load %arg1[%c0, %c0_0, %c0_1] : memref<1x8x32xf32, #tpu.memory_space<vmem>>, vector<1x8x32xf32>
    %1 = vector.shape_cast %0 : vector<1x8x32xf32> to vector<8x32xf32>
    %2 = arith.truncf %1 : vector<8x32xf32> to vector<8x32xbf16>
    %c0_2 = arith.constant 0 : index
    %c0_3 = arith.constant 0 : index
    %3 = vector.load %arg2[%c0_2, %c0_3] : memref<32x96xbf16, #tpu.memory_space<vmem>>, vector<32x96xbf16>
    %cst = arith.constant dense<0.000000e+00> : vector<8x96xf32>
    %4 = tpu.matmul %2, %3, %cst {dimension_numbers = #tpu.dot_dimension_numbers<[1], [0], [0], [1], [0, 0, 1, 1], [], []>} : vector<8x32xbf16>, vector<32x96xbf16>, vector<8x96xf32> -> vector<8x96xf32>
    %5 = arith.truncf %4 : vector<8x96xf32> to vector<8x96xbf16>
    %6 = vector.extract_strided_slice %5 {offsets = [0, 0], sizes = [8, 8], strides = [1, 1]} : vector<8x96xbf16> to vector<8x8xbf16>
    %7 = vector.extract_strided_slice %5 {offsets = [0, 32], sizes = [8, 8], strides = [1, 1]} : vector<8x96xbf16> to vector<8x8xbf16>
    %8 = vector.extract_strided_slice %5 {offsets = [0, 64], sizes = [8, 8], strides = [1, 1]} : vector<8x96xbf16> to vector<8x8xbf16>
    %cst_4 = arith.constant dense<0.000000e+00> : vector<8x8xf32>
    %9 = tpu.matmul %6, %7, %cst_4 {dimension_numbers = #tpu.dot_dimension_numbers<[1], [1], [0], [0], [0, 0, 1, 0], [], []>} : vector<8x8xbf16>, vector<8x8xbf16>, vector<8x8xf32> -> vector<8x8xf32>
    %cst_5 = arith.constant dense<0xFF800000> : vector<8xf32>
    %10 = vector.multi_reduction <maximumf>, %9, %cst_5 [1] : vector<8x8xf32> to vector<8xf32>
    %11 = vector.shape_cast %10 : vector<8xf32> to vector<8x1xf32>
    %12 = vector.broadcast %11 : vector<8x1xf32> to vector<8x8xf32>
    %13 = arith.subf %9, %12 : vector<8x8xf32>
    %14 = math.exp %13 : vector<8x8xf32>
    %cst_6 = arith.constant dense<0.000000e+00> : vector<8xf32>
    %15 = vector.multi_reduction <add>, %14, %cst_6 [1] : vector<8x8xf32> to vector<8xf32>
    %16 = vector.shape_cast %15 : vector<8xf32> to vector<8x1xf32>
    %17 = tpu.reciprocal %16 {approx = true} : vector<8x1xf32> -> vector<8x1xf32>
    %18 = vector.broadcast %17 : vector<8x1xf32> to vector<8x8xf32>
    %19 = arith.mulf %14, %18 : vector<8x8xf32>
    %20 = arith.truncf %19 : vector<8x8xf32> to vector<8x8xbf16>
    %cst_7 = arith.constant dense<0.000000e+00> : vector<8x8xf32>
    %21 = tpu.matmul %20, %8, %cst_7 {dimension_numbers = #tpu.dot_dimension_numbers<[1], [0], [0], [1], [0, 0, 1, 1], [], []>} : vector<8x8xbf16>, vector<8x8xbf16>, vector<8x8xf32> -> vector<8x8xf32>
    %22 = arith.truncf %21 : vector<8x8xf32> to vector<8x8xbf16>
    %c0_8 = arith.constant 0 : index
    %c0_9 = arith.constant 0 : index
    %23 = vector.load %arg6[%c0_8, %c0_9] : memref<8x32xbf16, #tpu.memory_space<vmem>>, vector<8x8xbf16>
    tpu.vector_store %arg6[%c0_8, %c0_9], %22 {strides = array<i32>} : memref<8x32xbf16, #tpu.memory_space<vmem>>, vector<8x8xbf16>,
    %24 = vector.extract_strided_slice %5 {offsets = [0, 8], sizes = [8, 8], strides = [1, 1]} : vector<8x96xbf16> to vector<8x8xbf16>
    %25 = vector.extract_strided_slice %5 {offsets = [0, 40], sizes = [8, 8], strides = [1, 1]} : vector<8x96xbf16> to vector<8x8xbf16>
    %26 = vector.extract_strided_slice %5 {offsets = [0, 72], sizes = [8, 8], strides = [1, 1]} : vector<8x96xbf16> to vector<8x8xbf16>
    %cst_10 = arith.constant dense<0.000000e+00> : vector<8x8xf32>
    %27 = tpu.matmul %24, %25, %cst_10 {dimension_numbers = #tpu.dot_dimension_numbers<[1], [1], [0], [0], [0, 0, 1, 0], [], []>} : vector<8x8xbf16>, vector<8x8xbf16>, vector<8x8xf32> -> vector<8x8xf32>
    %cst_11 = arith.constant dense<0xFF800000> : vector<8xf32>
    %28 = vector.multi_reduction <maximumf>, %27, %cst_11 [1] : vector<8x8xf32> to vector<8xf32>
    %29 = vector.shape_cast %28 : vector<8xf32> to vector<8x1xf32>
    %30 = vector.broadcast %29 : vector<8x1xf32> to vector<8x8xf32>
    %31 = arith.subf %27, %30 : vector<8x8xf32>
    %32 = math.exp %31 : vector<8x8xf32>
    %cst_12 = arith.constant dense<0.000000e+00> : vector<8xf32>
    %33 = vector.multi_reduction <add>, %32, %cst_12 [1] : vector<8x8xf32> to vector<8xf32>
    %34 = vector.shape_cast %33 : vector<8xf32> to vector<8x1xf32>
    %35 = tpu.reciprocal %34 {approx = true} : vector<8x1xf32> -> vector<8x1xf32>
    %36 = vector.broadcast %35 : vector<8x1xf32> to vector<8x8xf32>
    %37 = arith.mulf %32, %36 : vector<8x8xf32>
    %38 = arith.truncf %37 : vector<8x8xf32> to vector<8x8xbf16>
    %cst_13 = arith.constant dense<0.000000e+00> : vector<8x8xf32>
    %39 = tpu.matmul %38, %26, %cst_13 {dimension_numbers = #tpu.dot_dimension_numbers<[1], [0], [0], [1], [0, 0, 1, 1], [], []>} : vector<8x8xbf16>, vector<8x8xbf16>, vector<8x8xf32> -> vector<8x8xf32>
    %40 = arith.truncf %39 : vector<8x8xf32> to vector<8x8xbf16>
    %c0_14 = arith.constant 0 : index
    %c8 = arith.constant 8 : index
    %41 = vector.load %arg6[%c0_14, %c8] : memref<8x32xbf16, #tpu.memory_space<vmem>>, vector<8x8xbf16>
    tpu.vector_store %arg6[%c0_14, %c8], %40 {strides = array<i32>} : memref<8x32xbf16, #tpu.memory_space<vmem>>, vector<8x8xbf16>,
    %42 = vector.extract_strided_slice %5 {offsets = [0, 16], sizes = [8, 8], strides = [1, 1]} : vector<8x96xbf16> to vector<8x8xbf16>
    %43 = vector.extract_strided_slice %5 {offsets = [0, 48], sizes = [8, 8], strides = [1, 1]} : vector<8x96xbf16> to vector<8x8xbf16>
    %44 = vector.extract_strided_slice %5 {offsets = [0, 80], sizes = [8, 8], strides = [1, 1]} : vector<8x96xbf16> to vector<8x8xbf16>
    %cst_15 = arith.constant dense<0.000000e+00> : vector<8x8xf32>
    %45 = tpu.matmul %42, %43, %cst_15 {dimension_numbers = #tpu.dot_dimension_numbers<[1], [1], [0], [0], [0, 0, 1, 0], [], []>} : vector<8x8xbf16>, vector<8x8xbf16>, vector<8x8xf32> -> vector<8x8xf32>
    %cst_16 = arith.constant dense<0xFF800000> : vector<8xf32>
    %46 = vector.multi_reduction <maximumf>, %45, %cst_16 [1] : vector<8x8xf32> to vector<8xf32>
    %47 = vector.shape_cast %46 : vector<8xf32> to vector<8x1xf32>
    %48 = vector.broadcast %47 : vector<8x1xf32> to vector<8x8xf32>
    %49 = arith.subf %45, %48 : vector<8x8xf32>
    %50 = math.exp %49 : vector<8x8xf32>
    %cst_17 = arith.constant dense<0.000000e+00> : vector<8xf32>
    %51 = vector.multi_reduction <add>, %50, %cst_17 [1] : vector<8x8xf32> to vector<8xf32>
    %52 = vector.shape_cast %51 : vector<8xf32> to vector<8x1xf32>
    %53 = tpu.reciprocal %52 {approx = true} : vector<8x1xf32> -> vector<8x1xf32>
    %54 = vector.broadcast %53 : vector<8x1xf32> to vector<8x8xf32>
    %55 = arith.mulf %50, %54 : vector<8x8xf32>
    %56 = arith.truncf %55 : vector<8x8xf32> to vector<8x8xbf16>
    %cst_18 = arith.constant dense<0.000000e+00> : vector<8x8xf32>
    %57 = tpu.matmul %56, %44, %cst_18 {dimension_numbers = #tpu.dot_dimension_numbers<[1], [0], [0], [1], [0, 0, 1, 1], [], []>} : vector<8x8xbf16>, vector<8x8xbf16>, vector<8x8xf32> -> vector<8x8xf32>
    %58 = arith.truncf %57 : vector<8x8xf32> to vector<8x8xbf16>
    %c0_19 = arith.constant 0 : index
    %c16 = arith.constant 16 : index
    %59 = vector.load %arg6[%c0_19, %c16] : memref<8x32xbf16, #tpu.memory_space<vmem>>, vector<8x8xbf16>
    tpu.vector_store %arg6[%c0_19, %c16], %58 {strides = array<i32>} : memref<8x32xbf16, #tpu.memory_space<vmem>>, vector<8x8xbf16>,
    %60 = vector.extract_strided_slice %5 {offsets = [0, 24], sizes = [8, 8], strides = [1, 1]} : vector<8x96xbf16> to vector<8x8xbf16>
    %61 = vector.extract_strided_slice %5 {offsets = [0, 56], sizes = [8, 8], strides = [1, 1]} : vector<8x96xbf16> to vector<8x8xbf16>
    %62 = vector.extract_strided_slice %5 {offsets = [0, 88], sizes = [8, 8], strides = [1, 1]} : vector<8x96xbf16> to vector<8x8xbf16>
    %cst_20 = arith.constant dense<0.000000e+00> : vector<8x8xf32>
    %63 = tpu.matmul %60, %61, %cst_20 {dimension_numbers = #tpu.dot_dimension_numbers<[1], [1], [0], [0], [0, 0, 1, 0], [], []>} : vector<8x8xbf16>, vector<8x8xbf16>, vector<8x8xf32> -> vector<8x8xf32>
    %cst_21 = arith.constant dense<0xFF800000> : vector<8xf32>
    %64 = vector.multi_reduction <maximumf>, %63, %cst_21 [1] : vector<8x8xf32> to vector<8xf32>
    %65 = vector.shape_cast %64 : vector<8xf32> to vector<8x1xf32>
    %66 = vector.broadcast %65 : vector<8x1xf32> to vector<8x8xf32>
    %67 = arith.subf %63, %66 : vector<8x8xf32>
    %68 = math.exp %67 : vector<8x8xf32>
    %cst_22 = arith.constant dense<0.000000e+00> : vector<8xf32>
    %69 = vector.multi_reduction <add>, %68, %cst_22 [1] : vector<8x8xf32> to vector<8xf32>
    %70 = vector.shape_cast %69 : vector<8xf32> to vector<8x1xf32>
    %71 = tpu.reciprocal %70 {approx = true} : vector<8x1xf32> -> vector<8x1xf32>
    %72 = vector.broadcast %71 : vector<8x1xf32> to vector<8x8xf32>
    %73 = arith.mulf %68, %72 : vector<8x8xf32>
    %74 = arith.truncf %73 : vector<8x8xf32> to vector<8x8xbf16>
    %cst_23 = arith.constant dense<0.000000e+00> : vector<8x8xf32>
    %75 = tpu.matmul %74, %62, %cst_23 {dimension_numbers = #tpu.dot_dimension_numbers<[1], [0], [0], [1], [0, 0, 1, 1], [], []>} : vector<8x8xbf16>, vector<8x8xbf16>, vector<8x8xf32> -> vector<8x8xf32>
    %76 = arith.truncf %75 : vector<8x8xf32> to vector<8x8xbf16>
    %c0_24 = arith.constant 0 : index
    %c24 = arith.constant 24 : index
    %77 = vector.load %arg6[%c0_24, %c24] : memref<8x32xbf16, #tpu.memory_space<vmem>>, vector<8x8xbf16>
    tpu.vector_store %arg6[%c0_24, %c24], %76 {strides = array<i32>} : memref<8x32xbf16, #tpu.memory_space<vmem>>, vector<8x8xbf16>,
    %c0_25 = arith.constant 0 : index
    %c0_26 = arith.constant 0 : index
    %78 = vector.load %arg6[%c0_25, %c0_26] : memref<8x32xbf16, #tpu.memory_space<vmem>>, vector<8x32xbf16>
    %c0_27 = arith.constant 0 : index
    %c0_28 = arith.constant 0 : index
    %79 = vector.load %arg3[%c0_27, %c0_28] : memref<32x32xbf16, #tpu.memory_space<vmem>>, vector<32x32xbf16>
    %cst_29 = arith.constant dense<0.000000e+00> : vector<8x32xf32>
    %80 = tpu.matmul %78, %79, %cst_29 {dimension_numbers = #tpu.dot_dimension_numbers<[1], [0], [0], [1], [0, 0, 1, 1], [], []>} : vector<8x32xbf16>, vector<32x32xbf16>, vector<8x32xf32> -> vector<8x32xf32>
    %c0_30 = arith.constant 0 : index
    %c0_31 = arith.constant 0 : index
    %81 = vector.load %arg4[%c0_30, %c0_31] : memref<1x32xf32, #tpu.memory_space<vmem>>, vector<1x32xf32>
    %82 = vector.broadcast %81 : vector<1x32xf32> to vector<8x32xf32>
    %83 = arith.addf %80, %82 : vector<8x32xf32>
    %c0_32 = arith.constant 0 : index
    %c0_33 = arith.constant 0 : index
    %c0_34 = arith.constant 0 : index
    %84 = vector.load %arg5[%c0_32, %c0_33, %c0_34] : memref<1x8x32xf32, #tpu.memory_space<vmem>>, vector<1x8x32xf32>
    %85 = vector.shape_cast %84 : vector<1x8x32xf32> to vector<8x32xf32>
    %86 = vector.shape_cast %83 : vector<8x32xf32> to vector<1x8x32xf32>
    tpu.vector_store %arg5[%c0_32, %c0_33, %c0_34], %86 {strides = array<i32>} : memref<1x8x32xf32, #tpu.memory_space<vmem>>, vector<1x8x32xf32>,
    return
  }
  func.func @transform_0(%arg0: i32) -> (i32, i32, i32) {
    %c0_i32 = arith.constant 0 : i32
    %c0_i32_0 = arith.constant 0 : i32
    %c0_i32_1 = arith.constant 0 : i32
    return %arg0, %c0_i32, %c0_i32_0 : i32, i32, i32
  }
  func.func @transform_1(%arg0: i32) -> (i32, i32) {
    %c0_i32 = arith.constant 0 : i32
    %c0_i32_0 = arith.constant 0 : i32
    %c0_i32_1 = arith.constant 0 : i32
    return %c0_i32, %c0_i32_0 : i32, i32
  }
  func.func @transform_2(%arg0: i32) -> (i32, i32) {
    %c0_i32 = arith.constant 0 : i32
    %c0_i32_0 = arith.constant 0 : i32
    %c0_i32_1 = arith.constant 0 : i32
    return %c0_i32, %c0_i32_0 : i32, i32
  }
  func.func @transform_3(%arg0: i32) -> (i32, i32) {
    %c0_i32 = arith.constant 0 : i32
    %c0_i32_0 = arith.constant 0 : i32
    %c0_i32_1 = arith.constant 0 : i32
    return %c0_i32, %c0_i32_0 : i32, i32
  }
  func.func @transform_4(%arg0: i32) -> (i32, i32, i32) {
    %c0_i32 = arith.constant 0 : i32
    %c0_i32_0 = arith.constant 0 : i32
    %c0_i32_1 = arith.constant 0 : i32
    return %arg0, %c0_i32, %c0_i32_0 : i32, i32, i32
  }
}

</mosaic_0001>

<llo_original>
// kernel: tpu_custom_call.1
$region0: #{tpu_custom_call.1}
  #allocation0 [shape = 'u32[]', space=smem, size = 0x4, offset = 0x4, fixed_abs, tag = 'smem constant byte address 0x4 - core index']
  #allocation1 [shape = 'u32[144,128]{1,0:T(1,128)}', space=vmem, size = 0x12000, scoped, tag = 'internal scratch']
  #allocation2 [shape = 'bf16[8,32]{1,0:T(8,128)(2,1)}', space=vmem, size = 0x800, scoped, tag = 'scratch operand']
  %s0 = inlined_call_operand.hbm [shape: f32[2,8,32], index: 0, kind: input, shape index: {}]
  %s1 = inlined_call_operand.hbm [shape: bf16[32,96], index: 1, kind: input, shape index: {}]
  %s2 = inlined_call_operand.hbm [shape: bf16[32,32], index: 2, kind: input, shape index: {}]
  %s3 = inlined_call_operand.vmem [shape: f32[1,32], index: 3, kind: input, shape index: {}]
  %s4 = inlined_call_operand.hbm [shape: f32[2,8,32], index: 4, kind: output, shape index: {}]
  %s5 = sld [smem:[#allocation0]]
  $region61: #{tpu_custom_call.1} parent=0
    _
  %s7 = ssub.s32 1, %s5
  %s8 = scalar_select 0, %s7, %s5
  $region1: #{tpu_custom_call.1} parent=0
    #allocation3 [shape = 'u8[8192]{0}', space=vmem, size = 0x2000, scoped, tag = 'input window, operand 0']
    #allocation4 [shape = 's32[2]{0}', space=sflag, size = 0x8, scoped, tag = 'scoped memory for tpu_custom_call.1']
    #allocation5 [shape = 's32[2]{0}', space=sflag, size = 0x8, scoped, tag = 'scoped memory for tpu_custom_call.1']
    #allocation6 [shape = 'u8[8192]{0}', space=vmem, size = 0x2000, scoped, tag = 'input window, operand 1, single buffered']
    #allocation7 [shape = 's32[1]{0}', space=sflag, size = 0x4, scoped, tag = 'scoped memory for tpu_custom_call.1']
    #allocation8 [shape = 'u8[8192]{0}', space=vmem, size = 0x2000, scoped, tag = 'input window, operand 2, single buffered']
    #allocation9 [shape = 'u8[8192]{0}', space=vmem, size = 0x2000, scoped, tag = 'output window, operand 0']
    %9 = vsyncpa [#allocation4], 0
    %s10 = scalar_lea.sflag [#allocation4], 1
    %11 = vsyncpa %s10, 0
    %12 = vsyncpa [#allocation7], 0
    %13 = vsyncpa [#allocation5], 0
    %s14 = scalar_lea.sflag [#allocation5], 1
    %15 = vsyncpa %s14, 0
    loop: start=0, step=1, limit=4
    $region2: #{tpu_custom_call.1} parent=1 // loop_pre_header
      _
    $region3: #{tpu_custom_call.1} parent=1 // loop_header
      %s17 = sphi 0, %s21
      %p18 = scmp.ge.s32.totalorder %s17, 4
      %s27 = sphi 0, %s29
      %s30 = sphi 0, %s27
      %s31 = sphi 0, %s30
      %s47 = sphi 0, %s31
      %s51 = sphi 0, %s51
      %s53 = sphi 0, %s51
      %s54 = sphi 0, %s53
      %s68 = sphi 0, %s54
      %s72 = sphi 0, %s72
      %s74 = sphi 0, %s72
      %s75 = sphi 0, %s74
      %s89 = sphi 0, %s75
      %s93 = sphi 0, %s93
      %s95 = sphi 0, %s93
      %s96 = sphi 0, %s95
      %s110 = sphi 0, %s96
      %s116 = sphi 0, %s118
      %s119 = sphi 0, %s116
      %s120 = sphi 0, %s119
      %s136 = sphi 0, %s120
    $region4: #{tpu_custom_call.1} parent=1 // loop_header_branch
      %20 = sbr.rel (%p18) target = $region8
    $region5: #{tpu_custom_call.1} parent=1 // loop_body
      %s22 = ssub.s32 %s17, 1
      %s23 = ssub.s32 %s17, 2
      %s24 = sadd.s32 %s17, 1
      %s25 = ssub.s32 %s17, %s24
      %p26 = scmp.eq.s32.totalorder %s25, 0
      %s28 = sadd.s32 %s27, 1
      %s29 = scalar_select %p26, %s27, %s28
      %p32 = pneg %p26
      %p33 = scmp.eq.s32.totalorder %s17, 1
      %p34 = por %p32, %p33
      %p35 = scmp.ne.s32.totalorder %s27, %s30
      %p36 = scmp.eq.s32.totalorder %s17, 0
      %p37 = por %p35, %p36
      %p38 = scmp.ne.s32.totalorder %s27, %s30
      %p39 = scmp.eq.s32.totalorder %s22, 1
      %p40 = por %p38, %p39
      %p41 = scmp.ne.s32.totalorder %s30, %s31
      %p42 = scmp.eq.s32.totalorder %s22, 0
      %p43 = por %p41, %p42
      %p44 = scmp.ne.s32.totalorder %s30, %s31
      %p45 = scmp.eq.s32.totalorder %s23, 1
      %p46 = por %p44, %p45
      %p48 = scmp.ne.s32.totalorder %s31, %s47
      %p49 = scmp.eq.s32.totalorder %s23, 0
      %p50 = por %p48, %p49
      %s52 = sadd.s32 %s51, 1
      %p55 = scmp.eq.s32.totalorder %s17, 1
      %p56 = scmp.ne.s32.totalorder %s51, %s53
      %p57 = scmp.eq.s32.totalorder %s17, 0
      %p58 = por %p56, %p57
      %p59 = scmp.ne.s32.totalorder %s51, %s53
      %p60 = scmp.eq.s32.totalorder %s22, 1
      %p61 = por %p59, %p60
      %p62 = scmp.ne.s32.totalorder %s53, %s54
      %p63 = scmp.eq.s32.totalorder %s22, 0
      %p64 = por %p62, %p63
      %p65 = scmp.ne.s32.totalorder %s53, %s54
      %p66 = scmp.eq.s32.totalorder %s23, 1
      %p67 = por %p65, %p66
      %p69 = scmp.ne.s32.totalorder %s54, %s68
      %p70 = scmp.eq.s32.totalorder %s23, 0
      %p71 = por %p69, %p70
      %s73 = sadd.s32 %s72, 1
      %p76 = scmp.eq.s32.totalorder %s17, 1
      %p77 = scmp.ne.s32.totalorder %s72, %s74
      %p78 = scmp.eq.s32.totalorder %s17, 0
      %p79 = por %p77, %p78
      %p80 = scmp.ne.s32.totalorder %s72, %s74
      %p81 = scmp.eq.s32.totalorder %s22, 1
      %p82 = por %p80, %p81
      %p83 = scmp.ne.s32.totalorder %s74, %s75
      %p84 = scmp.eq.s32.totalorder %s22, 0
      %p85 = por %p83, %p84
      %p86 = scmp.ne.s32.totalorder %s74, %s75
      %p87 = scmp.eq.s32.totalorder %s23, 1
      %p88 = por %p86, %p87
      %p90 = scmp.ne.s32.totalorder %s75, %s89
      %p91 = scmp.eq.s32.totalorder %s23, 0
      %p92 = por %p90, %p91
      %s94 = sadd.s32 %s93, 1
      %p97 = scmp.eq.s32.totalorder %s17, 1
      %p98 = scmp.ne.s32.totalorder %s93, %s95
      %p99 = scmp.eq.s32.totalorder %s17, 0
      %p100 = por %p98, %p99
      %p101 = scmp.ne.s32.totalorder %s93, %s95
      %p102 = scmp.eq.s32.totalorder %s22, 1
      %p103 = por %p101, %p102
      %p104 = scmp.ne.s32.totalorder %s95, %s96
      %p105 = scmp.eq.s32.totalorder %s22, 0
      %p106 = por %p104, %p105
      %p107 = scmp.ne.s32.totalorder %s95, %s96
      %p108 = scmp.eq.s32.totalorder %s23, 1
      %p109 = por %p107, %p108
      %p111 = scmp.ne.s32.totalorder %s96, %s110
      %p112 = scmp.eq.s32.totalorder %s23, 0
      %p113 = por %p111, %p112
      %s114 = ssub.s32 %s17, %s24
      %p115 = scmp.eq.s32.totalorder %s114, 0
      %s117 = sadd.s32 %s116, 1
      %s118 = scalar_select %p115, %s116, %s117
      %p121 = pneg %p115
      %p122 = scmp.eq.s32.totalorder %s17, 1
      %p123 = por %p121, %p122
      %p124 = scmp.ne.s32.totalorder %s116, %s119
      %p125 = scmp.eq.s32.totalorder %s17, 0
      %p126 = por %p124, %p125
      %p127 = scmp.ne.s32.totalorder %s116, %s119
      %p128 = scmp.eq.s32.totalorder %s22, 1
      %p129 = por %p127, %p128
      %p130 = scmp.ne.s32.totalorder %s119, %s120
      %p131 = scmp.eq.s32.totalorder %s22, 0
      %p132 = por %p130, %p131
      %p133 = scmp.ne.s32.totalorder %s119, %s120
      %p134 = scmp.eq.s32.totalorder %s23, 1
      %p135 = por %p133, %p134
      %p137 = scmp.ne.s32.totalorder %s120, %s136
      %p138 = scmp.eq.s32.totalorder %s23, 0
      %p139 = por %p137, %p138
      %p140 = scmp.le.s32.totalorder 1, %s17
      %p141 = scmp.lt.s32.totalorder %s17, 3
      %p142 = pnand %p140, %p141
      %p143 = pneg %p142
      // Predicated region
      $region9: #{tpu_custom_call.1} parent=5 // pred_check
        _
      $region10: #{tpu_custom_call.1} parent=5 // pred_check_branch
        %145 = sbr.rel (%p142) target = $region12
      $region11: #{tpu_custom_call.1} parent=5 // pred_region
        %s146 = ssub.s32 %s17, 1
        // Predicated region
        $region13: #{tpu_custom_call.1} parent=11 // pred_check
          %p147 = pneg %p64
        $region14: #{tpu_custom_call.1} parent=11 // pred_check_branch
          %149 = sbr.rel (%p147) target = $region16
        $region15: #{tpu_custom_call.1} parent=11 // pred_region
          %s151 = ssub.s32 256, 256
          %152 = vsyncadd [#allocation7], %s151
          %s153 = sshll.u32 [#allocation6], 4
          %s154 = int_to_ptr.vmem [resolvable:$true] %s153
          %159 = dma.hbm_to_vmem [thread:$0]  %s1, 256, %s154, [#allocation7], 64, 64, 4
        $region16: #{tpu_custom_call.1} parent=11 // pred_fallthru
          _
        // Predicated region
        $region17: #{tpu_custom_call.1} parent=11 // pred_check
          %p160 = pneg %p85
        $region18: #{tpu_custom_call.1} parent=11 // pred_check_branch
          %162 = sbr.rel (%p160) target = $region20
        $region19: #{tpu_custom_call.1} parent=11 // pred_region
          %s164 = ssub.s32 256, 256
          %165 = vsyncadd [#allocation7], %s164
          %s166 = sshll.u32 [#allocation8], 4
          %s167 = int_to_ptr.vmem [resolvable:$true] %s166
          %172 = dma.hbm_to_vmem [thread:$0]  %s2, 256, %s167, [#allocation7], 64, 64, 4
        $region20: #{tpu_custom_call.1} parent=11 // pred_fallthru
          _
        // Predicated region
        $region21: #{tpu_custom_call.1} parent=11 // pred_check
          %p173 = pneg %p106
        $region22: #{tpu_custom_call.1} parent=11 // pred_check_branch
          %175 = sbr.rel (%p173) target = $region24
        $region23: #{tpu_custom_call.1} parent=11 // pred_region
          _
        $region24: #{tpu_custom_call.1} parent=11 // pred_fallthru
          _
      $region12: #{tpu_custom_call.1} parent=5 // pred_fallthru
        _
      %p176 = scmp.lt.s32.totalorder %s17, 2
      // Predicated region
      $region25: #{tpu_custom_call.1} parent=5 // pred_check
        %p177 = pneg %p176
      $region26: #{tpu_custom_call.1} parent=5 // pred_check_branch
        %179 = sbr.rel (%p177) target = $region28
      $region27: #{tpu_custom_call.1} parent=5 // pred_region
        // Predicated region
        $region29: #{tpu_custom_call.1} parent=27 // pred_check
          %p180 = pneg %p37
        $region30: #{tpu_custom_call.1} parent=27 // pred_check_branch
          %182 = sbr.rel (%p180) target = $region32
        $region31: #{tpu_custom_call.1} parent=27 // pred_region
          %s183 = sand.u32 %s27, 1
          %s184 = scalar_lea.sflag [#allocation4], %s183
          %s185 = sand.u32 %s27, 1
          %s186 = smul.addr %s185, 8
          %s187 = scalar_lea.vmem [#allocation3], %s186
          %s189 = ssub.s32 128, 128
          %190 = vsyncadd %s184, %s189
          %s191 = smul.addr %s17, 128
          %s192 = scalar_lea.hbm %s0, %s191
          %s194 = sshll.u32 %s187, 4
          %s195 = int_to_ptr.vmem [resolvable:$true] %s194
          %197 = dma.hbm_to_vmem [thread:$0]  %s192, 128, %s195, %s184
        $region32: #{tpu_custom_call.1} parent=27 // pred_fallthru
          _
      $region28: #{tpu_custom_call.1} parent=5 // pred_fallthru
        _
      %p198 = scmp.le.s32.totalorder 1, %s17
      %p199 = scmp.lt.s32.totalorder %s17, 3
      %p200 = pnand %p198, %p199
      %p201 = pneg %p200
      // Predicated region
      $region33: #{tpu_custom_call.1} parent=5 // pred_check
        _
      $region34: #{tpu_custom_call.1} parent=5 // pred_check_branch
        %203 = sbr.rel (%p200) target = $region36
      $region35: #{tpu_custom_call.1} parent=5 // pred_region
        %s204 = ssub.s32 %s17, 1
        %s205 = sand.u32 %s30, 1
        %s206 = scalar_lea.sflag [#allocation4], %s205
        %s207 = sand.u32 %s30, 1
        %s208 = smul.addr %s207, 8
        %s209 = scalar_lea.vmem [#allocation3], %s208
        // Predicated region
        $region37: #{tpu_custom_call.1} parent=35 // pred_check
          %p210 = pneg %p43
        $region38: #{tpu_custom_call.1} parent=35 // pred_check_branch
          %212 = sbr.rel (%p210) target = $region40
        $region39: #{tpu_custom_call.1} parent=35 // pred_region
          %213 = dma.done %s206, 128
        $region40: #{tpu_custom_call.1} parent=35 // pred_fallthru
          _
        // Predicated region
        $region41: #{tpu_custom_call.1} parent=35 // pred_check
          %p214 = pneg %p64
        $region42: #{tpu_custom_call.1} parent=35 // pred_check_branch
          %216 = sbr.rel (%p214) target = $region44
        $region43: #{tpu_custom_call.1} parent=35 // pred_region
          %217 = dma.done [#allocation7], 256
        $region44: #{tpu_custom_call.1} parent=35 // pred_fallthru
          _
        // Predicated region
        $region45: #{tpu_custom_call.1} parent=35 // pred_check
          %p218 = pneg %p85
        $region46: #{tpu_custom_call.1} parent=35 // pred_check_branch
          %220 = sbr.rel (%p218) target = $region48
        $region47: #{tpu_custom_call.1} parent=35 // pred_region
          %221 = dma.done [#allocation7], 256
        $region48: #{tpu_custom_call.1} parent=35 // pred_fallthru
          _
        %s222 = sand.u32 %s30, 1
        %s223 = scalar_lea.sflag [#allocation4], %s222
        %s224 = sand.u32 %s30, 1
        %s225 = smul.addr %s224, 8
        %s226 = scalar_lea.vmem [#allocation3], %s225
        %p227 = pneg %p43
        %p228 = pneg %p40
        %p229 = pneg %p64
        %p230 = pneg %p61
        %p231 = pneg %p85
        %p232 = pneg %p82
        %p233 = pneg %p106
        %p234 = pneg %p103
        %p235 = pneg %p132
        %p236 = pneg %p129
        %s237 = sand.u32 %s119, 1
        %s238 = scalar_lea.sflag [#allocation5], %s237
        %s239 = sand.u32 %s119, 1
        %s240 = smul.addr %s239, 8
        %s241 = scalar_lea.vmem [#allocation9], %s240
        %v243 = vld [vmem:[%s209] sm:$0xff]
        %v244 = vpack.c.bf16 %v243, %v243
        %v245 = vld [vmem:[#allocation6] sm:$0xf]
        %v246 = vld [vmem:[#allocation6 + $0x4] sm:$0xf]
        %v247 = vld [vmem:[#allocation6 + $0x8] sm:$0xf]
        %v248 = vld [vmem:[#allocation6 + $0xc] sm:$0xf]
        %v253 = vunpack.c.l.b16 %v245
        %v254 = vunpack.c.l.b16 %v246
        %v255 = vunpack.c.l.b16 %v247
        %v256 = vunpack.c.l.b16 %v248
        %v257 = vpack.c.b16 %v254, %v253
        %v258 = vpack.c.b16 %v256, %v255
        %vm261 = vcmask 261120
        %v263 = vsel %vm261, %v244, 0
        %265 = vmatprep.subr.bf16.mxu0 0
        %266 = vmatpush1.bf16.msra.mxu0 %v257
        %267 = vmatprep.subr.bf16.mxu0 0
        %268 = vmatpush1.bf16.msra.mxu0 %v258
        %269 = vmatprep.subr.bf16.mxu0 0
        %270 = vmatpush1.bf16.msra.mxu0 0
        %271 = vmatprep.subr.bf16.mxu0 0
        %272 = vmatpush1.bf16.msra.mxu0 0
        %273 = vmatprep.subr.bf16.mxu0 0
        %274 = vmatpush1.bf16.msra.mxu0 0
        %275 = vmatprep.subr.bf16.mxu0 0
        %276 = vmatpush1.bf16.msra.mxu0 0
        %277 = vmatprep.subr.bf16.mxu0 0
        %278 = vmatpush1.bf16.msra.mxu0 0
        %279 = vmatprep.subr.bf16.mxu0 0
        %280 = vmatpush1.bf16.msra.mxu0 0
        %281 = vmatprep.subr.bf16.mxu0 0
        %282 = vmatpush1.bf16.msra.mxu0 0
        %283 = vmatprep.subr.bf16.mxu0 0
        %284 = vmatpush1.bf16.msra.mxu0 0
        %285 = vmatprep.subr.bf16.mxu0 0
        %286 = vmatpush1.bf16.msra.mxu0 0
        %287 = vmatprep.subr.bf16.mxu0 0
        %288 = vmatpush1.bf16.msra.mxu0 0
        %289 = vmatprep.subr.bf16.mxu0 0
        %290 = vmatpush1.bf16.msra.mxu0 0
        %291 = vmatprep.subr.bf16.mxu0 0
        %292 = vmatpush1.bf16.msra.mxu0 0
        %293 = vmatprep.subr.bf16.mxu0 0
        %294 = vmatpush1.bf16.msra.mxu0 0
        %295 = vmatprep.subr.bf16.mxu0 0
        %296 = vmatpush1.bf16.msra.mxu0 0
        %297 = vmatprep.mubr.bf16.mxu0 0
        %298 = vmatmul.mubr.bf16.gmra.mrb[0].mxu0 %v263
        %v299 = vpop.f32.mrb[0].mxu0
        %v300 = vadd.f32 0.0, %v299
        %v301 = vpop.f32.mrb[0].mxu0
        %v302 = vpop.f32.mrb[0].mxu0
        %v303 = vpop.f32.mrb[0].mxu0
        %304 = vdwg.mxu0
        %v305 = vpack.c.bf16 %v300, %v300
        %307 = vrot.lane.b32.xlu0 %v305, 96
        %v308 = vpop.permute.xlu0 %307
        %vm309 = vcmask 64512
        %v311 = vsel %vm309, %v305, 0
        %v314 = vsel %vm309, %v308, 0
        %316 = vmatprep.subr.bf16.mxu0 0
        %317 = vmatpush1.bf16.xpose.msra.mxu0 %v314
        %318 = vmatprep.subr.bf16.mxu0 0
        %319 = vmatpush1.bf16.xpose.msra.mxu0 0
        %320 = vmatprep.subr.bf16.mxu0 0
        %321 = vmatpush1.bf16.xpose.msra.mxu0 0
        %322 = vmatprep.subr.bf16.mxu0 0
        %323 = vmatpush1.bf16.xpose.msra.mxu0 0
        %324 = vmatprep.subr.bf16.mxu0 0
        %325 = vmatpush1.bf16.xpose.msra.mxu0 0
        %326 = vmatprep.subr.bf16.mxu0 0
        %327 = vmatpush1.bf16.xpose.msra.mxu0 0
        %328 = vmatprep.subr.bf16.mxu0 0
        %329 = vmatpush1.bf16.xpose.msra.mxu0 0
        %330 = vmatprep.subr.bf16.mxu0 0
        %331 = vmatpush1.bf16.xpose.msra.mxu0 0
        %332 = vmatprep.subr.bf16.mxu0 0
        %333 = vmatpush1.bf16.xpose.msra.mxu0 0
        %334 = vmatprep.subr.bf16.mxu0 0
        %335 = vmatpush1.bf16.xpose.msra.mxu0 0
        %336 = vmatprep.subr.bf16.mxu0 0
        %337 = vmatpush1.bf16.xpose.msra.mxu0 0
        %338 = vmatprep.subr.bf16.mxu0 0
        %339 = vmatpush1.bf16.xpose.msra.mxu0 0
        %340 = vmatprep.subr.bf16.mxu0 0
        %341 = vmatpush1.bf16.xpose.msra.mxu0 0
        %342 = vmatprep.subr.bf16.mxu0 0
        %343 = vmatpush1.bf16.xpose.msra.mxu0 0
        %344 = vmatprep.subr.bf16.mxu0 0
        %345 = vmatpush1.bf16.xpose.msra.mxu0 0
        %346 = vmatprep.subr.bf16.mxu0 0
        %347 = vmatpush1.bf16.xpose.msra.mxu0 0
        %348 = vmatprep.mubr.bf16.mxu0 0
        %349 = vmatmul.mubr.bf16.gmra.mrb[0].mxu0 %v311
        %v350 = vpop.f32.mrb[0].mxu0
        %v351 = vadd.f32 0.0, %v350
        %v352 = vpop.f32.mrb[0].mxu0
        %v353 = vpop.f32.mrb[0].mxu0
        %v354 = vpop.f32.mrb[0].mxu0
        %355 = vdwg.mxu0
        %v356 = vsel %vm309, %v351, -inf
        %357 = vmax.xlane.f32.xlu0 %v356
        %v358 = vpop.xlane.xlu0 %357
        %v359 = vsub.f32 %v351, %v358
        %v360 = vmul.f32 %v359, 1.442695
        %v361 = vpow.pop %v360
        %v362 = vsel %vm309, %v361, 0.0
        %363 = vadd.xlane.f32.xlu0 %v362
        %v364 = vpop.xlane.xlu0 %363
        %v365 = vrcp.pop %v364
        %v366 = vmul.f32 %v361, %v365
        %v367 = vpack.c.bf16 %v366, %v366
        %368 = vrot.lane.b32.xlu0 %v305, 64
        %v369 = vpop.permute.xlu0 %368
        %v371 = vsel %vm309, %v367, 0
        %vm373 = vcmask 1043456
        %v375 = vsel %vm373, %v369, 0
        %377 = vmatprep.subr.bf16.mxu0 0
        %378 = vmatpush1.bf16.msra.mxu0 %v375
        %379 = vmatprep.subr.bf16.mxu0 0
        %380 = vmatpush1.bf16.msra.mxu0 0
        %381 = vmatprep.subr.bf16.mxu0 0
        %382 = vmatpush1.bf16.msra.mxu0 0
        %383 = vmatprep.subr.bf16.mxu0 0
        %384 = vmatpush1.bf16.msra.mxu0 0
        %385 = vmatprep.subr.bf16.mxu0 0
        %386 = vmatpush1.bf16.msra.mxu0 0
        %387 = vmatprep.subr.bf16.mxu0 0
        %388 = vmatpush1.bf16.msra.mxu0 0
        %389 = vmatprep.subr.bf16.mxu0 0
        %390 = vmatpush1.bf16.msra.mxu0 0
        %391 = vmatprep.subr.bf16.mxu0 0
        %392 = vmatpush1.bf16.msra.mxu0 0
        %393 = vmatprep.subr.bf16.mxu0 0
        %394 = vmatpush1.bf16.msra.mxu0 0
        %395 = vmatprep.subr.bf16.mxu0 0
        %396 = vmatpush1.bf16.msra.mxu0 0
        %397 = vmatprep.subr.bf16.mxu0 0
        %398 = vmatpush1.bf16.msra.mxu0 0
        %399 = vmatprep.subr.bf16.mxu0 0
        %400 = vmatpush1.bf16.msra.mxu0 0
        %401 = vmatprep.subr.bf16.mxu0 0
        %402 = vmatpush1.bf16.msra.mxu0 0
        %403 = vmatprep.subr.bf16.mxu0 0
        %404 = vmatpush1.bf16.msra.mxu0 0
        %405 = vmatprep.subr.bf16.mxu0 0
        %406 = vmatpush1.bf16.msra.mxu0 0
        %407 = vmatprep.subr.bf16.mxu0 0
        %408 = vmatpush1.bf16.msra.mxu0 0
        %409 = vmatprep.mubr.bf16.mxu0 0
        %410 = vmatmul.mubr.bf16.gmra.mrb[0].mxu0 %v371
        %v411 = vpop.f32.mrb[0].mxu0
        %v412 = vadd.f32 0.0, %v411
        %v413 = vpop.f32.mrb[0].mxu0
        %v414 = vpop.f32.mrb[0].mxu0
        %v415 = vpop.f32.mrb[0].mxu0
        %416 = vdwg.mxu0
        %v417 = vpack.c.bf16 %v412, %v412
        %vm418 = vcmask 60416
        %419 = vst.msk [vmem:[#allocation2] sm:$0xf] %vm418, %v417
        %420 = vrot.lane.b32.xlu0 %v305, 120
        %v421 = vpop.permute.xlu0 %420
        %422 = vrot.lane.b32.xlu0 %v305, 88
        %v423 = vpop.permute.xlu0 %422
        %v425 = vsel %vm309, %v421, 0
        %v428 = vsel %vm309, %v423, 0
        %430 = vmatprep.subr.bf16.mxu0 0
        %431 = vmatpush1.bf16.xpose.msra.mxu0 %v428
        %432 = vmatprep.subr.bf16.mxu0 0
        %433 = vmatpush1.bf16.xpose.msra.mxu0 0
        %434 = vmatprep.subr.bf16.mxu0 0
        %435 = vmatpush1.bf16.xpose.msra.mxu0 0
        %436 = vmatprep.subr.bf16.mxu0 0
        %437 = vmatpush1.bf16.xpose.msra.mxu0 0
        %438 = vmatprep.subr.bf16.mxu0 0
        %439 = vmatpush1.bf16.xpose.msra.mxu0 0
        %440 = vmatprep.subr.bf16.mxu0 0
        %441 = vmatpush1.bf16.xpose.msra.mxu0 0
        %442 = vmatprep.subr.bf16.mxu0 0
        %443 = vmatpush1.bf16.xpose.msra.mxu0 0
        %444 = vmatprep.subr.bf16.mxu0 0
        %445 = vmatpush1.bf16.xpose.msra.mxu0 0
        %446 = vmatprep.subr.bf16.mxu0 0
        %447 = vmatpush1.bf16.xpose.msra.mxu0 0
        %448 = vmatprep.subr.bf16.mxu0 0
        %449 = vmatpush1.bf16.xpose.msra.mxu0 0
        %450 = vmatprep.subr.bf16.mxu0 0
        %451 = vmatpush1.bf16.xpose.msra.mxu0 0
        %452 = vmatprep.subr.bf16.mxu0 0
        %453 = vmatpush1.bf16.xpose.msra.mxu0 0
        %454 = vmatprep.subr.bf16.mxu0 0
        %455 = vmatpush1.bf16.xpose.msra.mxu0 0
        %456 = vmatprep.subr.bf16.mxu0 0
        %457 = vmatpush1.bf16.xpose.msra.mxu0 0
        %458 = vmatprep.subr.bf16.mxu0 0
        %459 = vmatpush1.bf16.xpose.msra.mxu0 0
        %460 = vmatprep.subr.bf16.mxu0 0
        %461 = vmatpush1.bf16.xpose.msra.mxu0 0
        %462 = vmatprep.mubr.bf16.mxu0 0
        %463 = vmatmul.mubr.bf16.gmra.mrb[0].mxu0 %v425
        %v464 = vpop.f32.mrb[0].mxu0
        %v465 = vadd.f32 0.0, %v464
        %v466 = vpop.f32.mrb[0].mxu0
        %v467 = vpop.f32.mrb[0].mxu0
        %v468 = vpop.f32.mrb[0].mxu0
        %469 = vdwg.mxu0
        %v470 = vsel %vm309, %v465, -inf
        %471 = vmax.xlane.f32.xlu0 %v470
        %v472 = vpop.xlane.xlu0 %471
        %v473 = vsub.f32 %v465, %v472
        %v474 = vmul.f32 %v473, 1.442695
        %v475 = vpow.pop %v474
        %v476 = vsel %vm309, %v475, 0.0
        %477 = vadd.xlane.f32.xlu0 %v476
        %v478 = vpop.xlane.xlu0 %477
        %v479 = vrcp.pop %v478
        %v480 = vmul.f32 %v475, %v479
        %v481 = vpack.c.bf16 %v480, %v480
        %482 = vrot.lane.b32.xlu0 %v305, 56
        %v483 = vpop.permute.xlu0 %482
        %v485 = vsel %vm309, %v481, 0
        %v488 = vsel %vm373, %v483, 0
        %490 = vmatprep.subr.bf16.mxu0 0
        %491 = vmatpush1.bf16.msra.mxu0 %v488
        %492 = vmatprep.subr.bf16.mxu0 0
        %493 = vmatpush1.bf16.msra.mxu0 0
        %494 = vmatprep.subr.bf16.mxu0 0
        %495 = vmatpush1.bf16.msra.mxu0 0
        %496 = vmatprep.subr.bf16.mxu0 0
        %497 = vmatpush1.bf16.msra.mxu0 0
        %498 = vmatprep.subr.bf16.mxu0 0
        %499 = vmatpush1.bf16.msra.mxu0 0
        %500 = vmatprep.subr.bf16.mxu0 0
        %501 = vmatpush1.bf16.msra.mxu0 0
        %502 = vmatprep.subr.bf16.mxu0 0
        %503 = vmatpush1.bf16.msra.mxu0 0
        %504 = vmatprep.subr.bf16.mxu0 0
        %505 = vmatpush1.bf16.msra.mxu0 0
        %506 = vmatprep.subr.bf16.mxu0 0
        %507 = vmatpush1.bf16.msra.mxu0 0
        %508 = vmatprep.subr.bf16.mxu0 0
        %509 = vmatpush1.bf16.msra.mxu0 0
        %510 = vmatprep.subr.bf16.mxu0 0
        %511 = vmatpush1.bf16.msra.mxu0 0
        %512 = vmatprep.subr.bf16.mxu0 0
        %513 = vmatpush1.bf16.msra.mxu0 0
        %514 = vmatprep.subr.bf16.mxu0 0
        %515 = vmatpush1.bf16.msra.mxu0 0
        %516 = vmatprep.subr.bf16.mxu0 0
        %517 = vmatpush1.bf16.msra.mxu0 0
        %518 = vmatprep.subr.bf16.mxu0 0
        %519 = vmatpush1.bf16.msra.mxu0 0
        %520 = vmatprep.subr.bf16.mxu0 0
        %521 = vmatpush1.bf16.msra.mxu0 0
        %522 = vmatprep.mubr.bf16.mxu0 0
        %523 = vmatmul.mubr.bf16.gmra.mrb[0].mxu0 %v485
        %v524 = vpop.f32.mrb[0].mxu0
        %v525 = vadd.f32 0.0, %v524
        %v526 = vpop.f32.mrb[0].mxu0
        %v527 = vpop.f32.mrb[0].mxu0
        %v528 = vpop.f32.mrb[0].mxu0
        %529 = vdwg.mxu0
        %v530 = vpack.c.bf16 %v525, %v525
        %v532 = vunpack.c.l.b16 %v530
        %v533 = vpack.c.b16 %v532, %v532
        %534 = vrot.lane.b32.xlu0 %v533, 8
        %v535 = vpop.permute.xlu0 %534
        %vm537 = vcmask 126016
        %538 = vst.msk [vmem:[#allocation2] sm:$0xf] %vm537, %v535
        %539 = vrot.lane.b32.xlu0 %v305, 112
        %v540 = vpop.permute.xlu0 %539
        %541 = vrot.lane.b32.xlu0 %v305, 80
        %v542 = vpop.permute.xlu0 %541
        %v544 = vsel %vm309, %v540, 0
        %v547 = vsel %vm309, %v542, 0
        %549 = vmatprep.subr.bf16.mxu0 0
        %550 = vmatpush1.bf16.xpose.msra.mxu0 %v547
        %551 = vmatprep.subr.bf16.mxu0 0
        %552 = vmatpush1.bf16.xpose.msra.mxu0 0
        %553 = vmatprep.subr.bf16.mxu0 0
        %554 = vmatpush1.bf16.xpose.msra.mxu0 0
        %555 = vmatprep.subr.bf16.mxu0 0
        %556 = vmatpush1.bf16.xpose.msra.mxu0 0
        %557 = vmatprep.subr.bf16.mxu0 0
        %558 = vmatpush1.bf16.xpose.msra.mxu0 0
        %559 = vmatprep.subr.bf16.mxu0 0
        %560 = vmatpush1.bf16.xpose.msra.mxu0 0
        %561 = vmatprep.subr.bf16.mxu0 0
        %562 = vmatpush1.bf16.xpose.msra.mxu0 0
        %563 = vmatprep.subr.bf16.mxu0 0
        %564 = vmatpush1.bf16.xpose.msra.mxu0 0
        %565 = vmatprep.subr.bf16.mxu0 0
        %566 = vmatpush1.bf16.xpose.msra.mxu0 0
        %567 = vmatprep.subr.bf16.mxu0 0
        %568 = vmatpush1.bf16.xpose.msra.mxu0 0
        %569 = vmatprep.subr.bf16.mxu0 0
        %570 = vmatpush1.bf16.xpose.msra.mxu0 0
        %571 = vmatprep.subr.bf16.mxu0 0
        %572 = vmatpush1.bf16.xpose.msra.mxu0 0
        %573 = vmatprep.subr.bf16.mxu0 0
        %574 = vmatpush1.bf16.xpose.msra.mxu0 0
        %575 = vmatprep.subr.bf16.mxu0 0
        %576 = vmatpush1.bf16.xpose.msra.mxu0 0
        %577 = vmatprep.subr.bf16.mxu0 0
        %578 = vmatpush1.bf16.xpose.msra.mxu0 0
        %579 = vmatprep.subr.bf16.mxu0 0
        %580 = vmatpush1.bf16.xpose.msra.mxu0 0
        %581 = vmatprep.mubr.bf16.mxu0 0
        %582 = vmatmul.mubr.bf16.gmra.mrb[0].mxu0 %v544
        %v583 = vpop.f32.mrb[0].mxu0
        %v584 = vadd.f32 0.0, %v583
        %v585 = vpop.f32.mrb[0].mxu0
        %v586 = vpop.f32.mrb[0].mxu0
        %v587 = vpop.f32.mrb[0].mxu0
        %588 = vdwg.mxu0
        %v589 = vsel %vm309, %v584, -inf
        %590 = vmax.xlane.f32.xlu0 %v589
        %v591 = vpop.xlane.xlu0 %590
        %v592 = vsub.f32 %v584, %v591
        %v593 = vmul.f32 %v592, 1.442695
        %v594 = vpow.pop %v593
        %v595 = vsel %vm309, %v594, 0.0
        %596 = vadd.xlane.f32.xlu0 %v595
        %v597 = vpop.xlane.xlu0 %596
        %v598 = vrcp.pop %v597
        %v599 = vmul.f32 %v594, %v598
        %v600 = vpack.c.bf16 %v599, %v599
        %601 = vrot.lane.b32.xlu0 %v305, 48
        %v602 = vpop.permute.xlu0 %601
        %v604 = vsel %vm309, %v600, 0
        %v607 = vsel %vm373, %v602, 0
        %609 = vmatprep.subr.bf16.mxu0 0
        %610 = vmatpush1.bf16.msra.mxu0 %v607
        %611 = vmatprep.subr.bf16.mxu0 0
        %612 = vmatpush1.bf16.msra.mxu0 0
        %613 = vmatprep.subr.bf16.mxu0 0
        %614 = vmatpush1.bf16.msra.mxu0 0
        %615 = vmatprep.subr.bf16.mxu0 0
        %616 = vmatpush1.bf16.msra.mxu0 0
        %617 = vmatprep.subr.bf16.mxu0 0
        %618 = vmatpush1.bf16.msra.mxu0 0
        %619 = vmatprep.subr.bf16.mxu0 0
        %620 = vmatpush1.bf16.msra.mxu0 0
        %621 = vmatprep.subr.bf16.mxu0 0
        %622 = vmatpush1.bf16.msra.mxu0 0
        %623 = vmatprep.subr.bf16.mxu0 0
        %624 = vmatpush1.bf16.msra.mxu0 0
        %625 = vmatprep.subr.bf16.mxu0 0
        %626 = vmatpush1.bf16.msra.mxu0 0
        %627 = vmatprep.subr.bf16.mxu0 0
        %628 = vmatpush1.bf16.msra.mxu0 0
        %629 = vmatprep.subr.bf16.mxu0 0
        %630 = vmatpush1.bf16.msra.mxu0 0
        %631 = vmatprep.subr.bf16.mxu0 0
        %632 = vmatpush1.bf16.msra.mxu0 0
        %633 = vmatprep.subr.bf16.mxu0 0
        %634 = vmatpush1.bf16.msra.mxu0 0
        %635 = vmatprep.subr.bf16.mxu0 0
        %636 = vmatpush1.bf16.msra.mxu0 0
        %637 = vmatprep.subr.bf16.mxu0 0
        %638 = vmatpush1.bf16.msra.mxu0 0
        %639 = vmatprep.subr.bf16.mxu0 0
        %640 = vmatpush1.bf16.msra.mxu0 0
        %641 = vmatprep.mubr.bf16.mxu0 0
        %642 = vmatmul.mubr.bf16.gmra.mrb[0].mxu0 %v604
        %v643 = vpop.f32.mrb[0].mxu0
        %v644 = vadd.f32 0.0, %v643
        %v645 = vpop.f32.mrb[0].mxu0
        %v646 = vpop.f32.mrb[0].mxu0
        %v647 = vpop.f32.mrb[0].mxu0
        %648 = vdwg.mxu0
        %v649 = vpack.c.bf16 %v644, %v644
        %v651 = vunpack.c.l.b16 %v649
        %v652 = vpack.c.b16 %v651, %v651
        %653 = vrot.lane.b32.xlu0 %v652, 16
        %v654 = vpop.permute.xlu0 %653
        %vm656 = vcmask 191616
        %657 = vst.msk [vmem:[#allocation2] sm:$0xf] %vm656, %v654
        %658 = vrot.lane.b32.xlu0 %v305, 104
        %v659 = vpop.permute.xlu0 %658
        %660 = vrot.lane.b32.xlu0 %v305, 72
        %v661 = vpop.permute.xlu0 %660
        %v663 = vsel %vm309, %v659, 0
        %v666 = vsel %vm309, %v661, 0
        %668 = vmatprep.subr.bf16.mxu0 0
        %669 = vmatpush1.bf16.xpose.msra.mxu0 %v666
        %670 = vmatprep.subr.bf16.mxu0 0
        %671 = vmatpush1.bf16.xpose.msra.mxu0 0
        %672 = vmatprep.subr.bf16.mxu0 0
        %673 = vmatpush1.bf16.xpose.msra.mxu0 0
        %674 = vmatprep.subr.bf16.mxu0 0
        %675 = vmatpush1.bf16.xpose.msra.mxu0 0
        %676 = vmatprep.subr.bf16.mxu0 0
        %677 = vmatpush1.bf16.xpose.msra.mxu0 0
        %678 = vmatprep.subr.bf16.mxu0 0
        %679 = vmatpush1.bf16.xpose.msra.mxu0 0
        %680 = vmatprep.subr.bf16.mxu0 0
        %681 = vmatpush1.bf16.xpose.msra.mxu0 0
        %682 = vmatprep.subr.bf16.mxu0 0
        %683 = vmatpush1.bf16.xpose.msra.mxu0 0
        %684 = vmatprep.subr.bf16.mxu0 0
        %685 = vmatpush1.bf16.xpose.msra.mxu0 0
        %686 = vmatprep.subr.bf16.mxu0 0
        %687 = vmatpush1.bf16.xpose.msra.mxu0 0
        %688 = vmatprep.subr.bf16.mxu0 0
        %689 = vmatpush1.bf16.xpose.msra.mxu0 0
        %690 = vmatprep.subr.bf16.mxu0 0
        %691 = vmatpush1.bf16.xpose.msra.mxu0 0
        %692 = vmatprep.subr.bf16.mxu0 0
        %693 = vmatpush1.bf16.xpose.msra.mxu0 0
        %694 = vmatprep.subr.bf16.mxu0 0
        %695 = vmatpush1.bf16.xpose.msra.mxu0 0
        %696 = vmatprep.subr.bf16.mxu0 0
        %697 = vmatpush1.bf16.xpose.msra.mxu0 0
        %698 = vmatprep.subr.bf16.mxu0 0
        %699 = vmatpush1.bf16.xpose.msra.mxu0 0
        %700 = vmatprep.mubr.bf16.mxu0 0
        %701 = vmatmul.mubr.bf16.gmra.mrb[0].mxu0 %v663
        %v702 = vpop.f32.mrb[0].mxu0
        %v703 = vadd.f32 0.0, %v702
        %v704 = vpop.f32.mrb[0].mxu0
        %v705 = vpop.f32.mrb[0].mxu0
        %v706 = vpop.f32.mrb[0].mxu0
        %707 = vdwg.mxu0
        %v708 = vsel %vm309, %v703, -inf
        %709 = vmax.xlane.f32.xlu0 %v708
        %v710 = vpop.xlane.xlu0 %709
        %v711 = vsub.f32 %v703, %v710
        %v712 = vmul.f32 %v711, 1.442695
        %v713 = vpow.pop %v712
        %v714 = vsel %vm309, %v713, 0.0
        %715 = vadd.xlane.f32.xlu0 %v714
        %v716 = vpop.xlane.xlu0 %715
        %v717 = vrcp.pop %v716
        %v718 = vmul.f32 %v713, %v717
        %v719 = vpack.c.bf16 %v718, %v718
        %720 = vrot.lane.b32.xlu0 %v305, 40
        %v721 = vpop.permute.xlu0 %720
        %v723 = vsel %vm309, %v719, 0
        %v726 = vsel %vm373, %v721, 0
        %728 = vmatprep.subr.bf16.mxu0 0
        %729 = vmatpush1.bf16.msra.mxu0 %v726
        %730 = vmatprep.subr.bf16.mxu0 0
        %731 = vmatpush1.bf16.msra.mxu0 0
        %732 = vmatprep.subr.bf16.mxu0 0
        %733 = vmatpush1.bf16.msra.mxu0 0
        %734 = vmatprep.subr.bf16.mxu0 0
        %735 = vmatpush1.bf16.msra.mxu0 0
        %736 = vmatprep.subr.bf16.mxu0 0
        %737 = vmatpush1.bf16.msra.mxu0 0
        %738 = vmatprep.subr.bf16.mxu0 0
        %739 = vmatpush1.bf16.msra.mxu0 0
        %740 = vmatprep.subr.bf16.mxu0 0
        %741 = vmatpush1.bf16.msra.mxu0 0
        %742 = vmatprep.subr.bf16.mxu0 0
        %743 = vmatpush1.bf16.msra.mxu0 0
        %744 = vmatprep.subr.bf16.mxu0 0
        %745 = vmatpush1.bf16.msra.mxu0 0
        %746 = vmatprep.subr.bf16.mxu0 0
        %747 = vmatpush1.bf16.msra.mxu0 0
        %748 = vmatprep.subr.bf16.mxu0 0
        %749 = vmatpush1.bf16.msra.mxu0 0
        %750 = vmatprep.subr.bf16.mxu0 0
        %751 = vmatpush1.bf16.msra.mxu0 0
        %752 = vmatprep.subr.bf16.mxu0 0
        %753 = vmatpush1.bf16.msra.mxu0 0
        %754 = vmatprep.subr.bf16.mxu0 0
        %755 = vmatpush1.bf16.msra.mxu0 0
        %756 = vmatprep.subr.bf16.mxu0 0
        %757 = vmatpush1.bf16.msra.mxu0 0
        %758 = vmatprep.subr.bf16.mxu0 0
        %759 = vmatpush1.bf16.msra.mxu0 0
        %760 = vmatprep.mubr.bf16.mxu0 0
        %761 = vmatmul.mubr.bf16.gmra.mrb[0].mxu0 %v723
        %v762 = vpop.f32.mrb[0].mxu0
        %v763 = vadd.f32 0.0, %v762
        %v764 = vpop.f32.mrb[0].mxu0
        %v765 = vpop.f32.mrb[0].mxu0
        %v766 = vpop.f32.mrb[0].mxu0
        %767 = vdwg.mxu0
        %v768 = vpack.c.bf16 %v763, %v763
        %v770 = vunpack.c.l.b16 %v768
        %v771 = vpack.c.b16 %v770, %v770
        %772 = vrot.lane.b32.xlu0 %v771, 24
        %v773 = vpop.permute.xlu0 %772
        %vm775 = vcmask 257216
        %776 = vst.msk [vmem:[#allocation2] sm:$0xf] %vm775, %v773
        %v777 = vld [vmem:[#allocation2] sm:$0xf]
        %v778 = vld [vmem:[#allocation8] sm:$0xf]
        %v779 = vld [vmem:[#allocation8 + $0x4] sm:$0xf]
        %v780 = vld [vmem:[#allocation8 + $0x8] sm:$0xf]
        %v781 = vld [vmem:[#allocation8 + $0xc] sm:$0xf]
        %v782 = vld [vmem:[%s3] sm:$0x1]
        %v784 = vlaneseq
        %v785 = vshrl.u32 %v784, 7
        %v786 = vsub.s32 0, %v785
        %v787 = vrot.slane %v782, %v786
        %v793 = vunpack.c.l.b16 %v778
        %v794 = vunpack.c.l.b16 %v779
        %v795 = vunpack.c.l.b16 %v780
        %v796 = vunpack.c.l.b16 %v781
        %v797 = vpack.c.b16 %v794, %v793
        %v798 = vpack.c.b16 %v796, %v795
        %v802 = vsel %vm261, %v777, 0
        %804 = vmatprep.subr.bf16.mxu0 0
        %805 = vmatpush1.bf16.msra.mxu0 %v797
        %806 = vmatprep.subr.bf16.mxu0 0
        %807 = vmatpush1.bf16.msra.mxu0 %v798
        %808 = vmatprep.subr.bf16.mxu0 0
        %809 = vmatpush1.bf16.msra.mxu0 0
        %810 = vmatprep.subr.bf16.mxu0 0
        %811 = vmatpush1.bf16.msra.mxu0 0
        %812 = vmatprep.subr.bf16.mxu0 0
        %813 = vmatpush1.bf16.msra.mxu0 0
        %814 = vmatprep.subr.bf16.mxu0 0
        %815 = vmatpush1.bf16.msra.mxu0 0
        %816 = vmatprep.subr.bf16.mxu0 0
        %817 = vmatpush1.bf16.msra.mxu0 0
        %818 = vmatprep.subr.bf16.mxu0 0
        %819 = vmatpush1.bf16.msra.mxu0 0
        %820 = vmatprep.subr.bf16.mxu0 0
        %821 = vmatpush1.bf16.msra.mxu0 0
        %822 = vmatprep.subr.bf16.mxu0 0
        %823 = vmatpush1.bf16.msra.mxu0 0
        %824 = vmatprep.subr.bf16.mxu0 0
        %825 = vmatpush1.bf16.msra.mxu0 0
        %826 = vmatprep.subr.bf16.mxu0 0
        %827 = vmatpush1.bf16.msra.mxu0 0
        %828 = vmatprep.subr.bf16.mxu0 0
        %829 = vmatpush1.bf16.msra.mxu0 0
        %830 = vmatprep.subr.bf16.mxu0 0
        %831 = vmatpush1.bf16.msra.mxu0 0
        %832 = vmatprep.subr.bf16.mxu0 0
        %833 = vmatpush1.bf16.msra.mxu0 0
        %834 = vmatprep.subr.bf16.mxu0 0
        %835 = vmatpush1.bf16.msra.mxu0 0
        %836 = vmatprep.mubr.bf16.mxu0 0
        %837 = vmatmul.mubr.bf16.gmra.mrb[0].mxu0 %v802
        %v838 = vpop.f32.mrb[0].mxu0
        %v839 = vadd.f32 %v787, %v838
        %v840 = vpop.f32.mrb[0].mxu0
        %v841 = vpop.f32.mrb[0].mxu0
        %v842 = vpop.f32.mrb[0].mxu0
        %843 = vdwg.mxu0
        %844 = vst.msk [vmem:[%s241] sm:$0xff] %vm261, %v839
        %s845 = sand.u32 %s119, 1
        %s846 = scalar_lea.sflag [#allocation5], %s845
        %s847 = sand.u32 %s119, 1
        %s848 = smul.addr %s847, 8
        %s849 = scalar_lea.vmem [#allocation9], %s848
        // Predicated region
        $region49: #{tpu_custom_call.1} parent=35 // pred_check
          %p850 = pneg %p129
        $region50: #{tpu_custom_call.1} parent=35 // pred_check_branch
          %852 = sbr.rel (%p850) target = $region52
        $region51: #{tpu_custom_call.1} parent=35 // pred_region
          %s854 = ssub.s32 128, 128
          %855 = vsyncadd %s846, %s854
          %s856 = smul.addr %s22, 128
          %s857 = scalar_lea.hbm %s4, %s856
          %s859 = sshll.u32 %s849, 4
          %s860 = int_to_ptr.vmem [resolvable:$true] %s859
          %862 = dma.vmem_to_hbm [thread:$0]  %s860, 128, %s857, %s846
        $region52: #{tpu_custom_call.1} parent=35 // pred_fallthru
          _
      $region36: #{tpu_custom_call.1} parent=5 // pred_fallthru
        _
      %p863 = scmp.le.s32.totalorder 2, %s17
      // Predicated region
      $region53: #{tpu_custom_call.1} parent=5 // pred_check
        %p864 = pneg %p863
      $region54: #{tpu_custom_call.1} parent=5 // pred_check_branch
        %866 = sbr.rel (%p864) target = $region56
      $region55: #{tpu_custom_call.1} parent=5 // pred_region
        %s867 = ssub.s32 %s17, 2
        // Predicated region
        $region57: #{tpu_custom_call.1} parent=55 // pred_check
          %p868 = pneg %p135
        $region58: #{tpu_custom_call.1} parent=55 // pred_check_branch
          %870 = sbr.rel (%p868) target = $region60
        $region59: #{tpu_custom_call.1} parent=55 // pred_region
          %s871 = sand.u32 %s120, 1
          %s872 = scalar_lea.sflag [#allocation5], %s871
          %s873 = sand.u32 %s120, 1
          %s874 = smul.addr %s873, 8
          %s875 = scalar_lea.vmem [#allocation9], %s874
          %876 = dma.done %s872, 128
        $region60: #{tpu_custom_call.1} parent=55 // pred_fallthru
          _
      $region56: #{tpu_custom_call.1} parent=5 // pred_fallthru
        _
    $region6: #{tpu_custom_call.1} parent=1 // loop_footer
      %s21 = sadd.s32 1, %s17
    $region7: #{tpu_custom_call.1} parent=1 // loop_footer_branch
      %16 = sbr.rel target = $region3
    $region8: #{tpu_custom_call.1} parent=1 // loop_exit
      _
    %877 = vsyncpa [#allocation4], 1
    %s878 = scalar_lea.sflag [#allocation4], 1
    %879 = vsyncpa %s878, 1
    %880 = vsyncpa [#allocation7], 1
    %881 = vsyncpa [#allocation5], 1
    %s882 = scalar_lea.sflag [#allocation5], 1
    %883 = vsyncpa %s882, 1

</llo_original>
